<compile_context>
chip_gen: v6e
topology: v6e:2x2x1
jax: 0.10.0
libtpu: 0.0.40
codegen_flags: <defaults>
</compile_context>

<pallas_src>
import functools

import jax
import jax.numpy as jnp
import numpy as np
from jax.experimental import pallas as pl
from jax.experimental.pallas import tpu as pltpu

# ---------------- synthetic teacher config ----------------
C_IN = 4       # input channels
C_OUT = 32     # conv output channels / pooled feature width
NCLS = 10      # classifier classes
H = W = 16     # spatial size
KH = KW = 3    # conv kernel
HW = H * W                     # 256  -> lane-dense minor dim (2 x 128)
KDIM = KH * KW * C_IN          # 36

B_TILE = 128   # max batch elements per grid step


def _round_up(x, m):
    return ((x + m - 1) // m) * m


def _pick_tile(batch):
    """Batch-block size.

    Multiple of 8 (or == padded batch) so the 2-D output block (bt, C_OUT)
    satisfies the (8,128) sublane rule; for medium batches pick >=2 grid steps
    so the 'parallel' axis can shard across v7x's two TensorCores.
    """
    if batch >= 2 * B_TILE:
        return B_TILE
    if batch >= 16:
        return _round_up((batch + 1) // 2, 8)
    return batch  # tiny batch: single block (bt == padded batch)


# ---------------- Pallas kernel: flipped conv matmul + ReLU + lane-axis pool ----------------
def _teacher_kernel(p_ref, w_ref, pooled_ref):
    # p_ref:      (bt, KDIM, HW)  bf16 lane-dense im2col patches for a batch block
    # w_ref:      (C_OUT, KDIM)   bf16 flattened conv weight (resident)
    # pooled_ref: (bt, C_OUT)     f32  post-ReLU global-average-pooled features
    bt = p_ref.shape[0]
    w_b = jnp.broadcast_to(w_ref[...], (bt,) + w_ref.shape)       # (bt, C_OUT, KDIM)

    # Per batch element: (C_OUT, KDIM) @ (KDIM, HW) — HW=256 is the MXU's fully
    # lane-dense stationary N dim; f32 accumulation on bf16 operands.
    feat = jax.lax.dot_general(
        w_b, p_ref[...],
        dimension_numbers=(((2,), (1,)), ((0,), (0,))),
        preferred_element_type=jnp.float32)                        # (bt, C_OUT, HW) MXU
    feat = jnp.maximum(feat, 0.0)                                  # ReLU (VPU)

    # Global average pool = lane-axis reduce (XLU slot); no pool matrix, no iota.
    pooled_ref[...] = jnp.sum(feat, axis=-1) * jnp.float32(1.0 / HW)


@functools.partial(jax.jit, static_argnames=("bt",))
def _teacher_pallas(patches, w2, *, bt):
    """patches: (B_pad, KDIM, HW) bf16; w2: (C_OUT, KDIM) bf16 -> (B_pad, C_OUT) f32."""
    b_pad, kdim, hw = patches.shape
    grid = b_pad // bt

    cost = pl.CostEstimate(
        flops=2 * b_pad * C_OUT * kdim * hw,
        transcendentals=0,
        bytes_accessed=b_pad * kdim * hw * 2 + kdim * C_OUT * 2 + b_pad * C_OUT * 4)

    return pl.pallas_call(
        _teacher_kernel,
        out_shape=jax.ShapeDtypeStruct((b_pad, C_OUT), jnp.float32),
        grid_spec=pltpu.PrefetchScalarGridSpec(
            num_scalar_prefetch=0,
            grid=(grid,),
            in_specs=[
                pl.BlockSpec((bt, kdim, hw), lambda b: (b, 0, 0)),
                pl.BlockSpec((C_OUT, kdim), lambda b: (0, 0)),     # resident weight
            ],
            out_specs=pl.BlockSpec((bt, C_OUT), lambda b: (b, 0)),
        ),
        compiler_params=pltpu.CompilerParams(
            dimension_semantics=("parallel",),
            vmem_limit_bytes=32 * 1024 * 1024),
        cost_estimate=cost,
    )(patches, w2)


# ---------------- glue: NCHW -> lane-dense im2col (B, KDIM, HW) ----------------
def _im2col_3x3(x_nchw_f32):
    """NCHW -> (B, KDIM, HW) patches with k = (ky*KW + kx)*C_IN + c (tap-major)."""
    b = x_nchw_f32.shape[0]
    xp = jnp.pad(x_nchw_f32, ((0, 0), (0, 0), (1, 1), (1, 1)))
    cols = []
    for ky in range(KH):
        for kx in range(KW):
            cols.append(xp[:, :, ky:ky + H, kx:kx + W].reshape(b, C_IN, HW))
    return jnp.concatenate(cols, axis=1)                           # (B, 36, 256)


class TeacherParams:
    """Deterministic synthetic teacher parameters."""

    def __init__(self, key):
        k1, k2, k3 = jax.random.split(key, 3)
        # conv weight in HWIO (kh, kw, C_in, C_out)
        self.wc = jax.random.normal(k1, (KH, KW, C_IN, C_OUT), jnp.float32) * 0.1
        self.wf = jax.random.normal(k2, (C_OUT, NCLS), jnp.float32) * 0.1
        self.bf = jax.random.normal(k3, (1, NCLS), jnp.float32) * 0.1
        # Cached once (review item): (C_OUT, KDIM) bf16 with k ordering matching
        # _im2col_3x3: k = (ky*KW + kx)*C_IN + c.
        self.w2_bf16 = (jnp.transpose(self.wc, (3, 0, 1, 2))
                        .reshape(C_OUT, KDIM).astype(jnp.bfloat16))


def teacher_forward(params, x_nchw):
    b = x_nchw.shape[0]
    bt = _pick_tile(b)
    b_pad = _round_up(b, bt)
    x = x_nchw.astype(jnp.float32)
    if b_pad != b:
        # Pad the RAW input (2 KB/elem), not the 18 KB/elem patch tensor.
        x = jnp.pad(x, ((0, b_pad - b), (0, 0), (0, 0), (0, 0)))
    patches = _im2col_3x3(x).astype(jnp.bfloat16)                  # (B_pad, 36, 256)
    pooled = _teacher_pallas(patches, params.w2_bf16, bt=bt)[:b]   # (B, C_OUT) f32
    # Tiny classifier stays in XLA (32x10 is lane-sparse / degenerate-M in-kernel).
    return pooled @ params.wf + params.bf                          # (B, NCLS)


def dist_teacher_forward(params, ld_batch, ud_batch):
    """Mirrors DistTeacher.forward(ld_batch, ud_batch)."""
    if ld_batch is not None:
        # Fuse both batches into one pallas_call, then split the logits.
        b_ld = ld_batch.shape[0]
        logits = teacher_forward(params,
                                 jnp.concatenate([ld_batch, ud_batch], axis=0))
        return logits[:b_ld], logits[b_ld:]
    else:
        return None, teacher_forward(params, ud_batch)


# ---------------- pure-JAX reference for sanity check ----------------
def _teacher_reference(params, x_nchw):
    x = jnp.transpose(x_nchw, (0, 2, 3, 1)).astype(jnp.float32)    # NHWC
    feat = jax.lax.conv_general_dilated(
        x, params.wc, window_strides=(1, 1), padding="SAME",
        dimension_numbers=("NHWC", "HWIO", "NHWC"))
    feat = jnp.maximum(feat, 0.0)
    pooled = jnp.mean(feat, axis=(1, 2))                           # (B, C_OUT)
    return pooled @ params.wf + params.bf


if __name__ == "__main__":
    key = jax.random.PRNGKey(0)
    kp, kl, ku = jax.random.split(key, 3)

    params = TeacherParams(kp)
    ld_batch = jax.random.normal(kl, (2, C_IN, H, W), jnp.float32)  # labeled, NCHW
    ud_batch = jax.random.normal(ku, (2, C_IN, H, W), jnp.float32)  # unlabeled, NCHW

    # Branch 1: both batches present (single fused pallas_call).
    ld_out, ud_out = dist_teacher_forward(params, ld_batch, ud_batch)
    jax.block_until_ready((ld_out, ud_out))

    # Branch 2: ld_batch is None.
    none_out, ud_only = dist_teacher_forward(params, None, ud_batch)
    assert none_out is None
    jax.block_until_ready(ud_only)

    # Sanity-check against a pure-JAX f32 reference (bf16 operands -> looser tol).
    ref_ld = _teacher_reference(params, ld_batch)
    ref_ud = _teacher_reference(params, ud_batch)
    np.testing.assert_allclose(np.asarray(ld_out), np.asarray(ref_ld), rtol=2e-2, atol=2e-2)
    np.testing.assert_allclose(np.asarray(ud_out), np.asarray(ref_ud), rtol=2e-2, atol=2e-2)
    np.testing.assert_allclose(np.asarray(ud_only), np.asarray(ref_ud), rtol=2e-2, atol=2e-2)

    print("KERNEL_OK")
</pallas_src>

<mosaic_0001>
module attributes {stable_mosaic.version = 11 : i64} {
  func.func @_teacher_kernel(%arg0: i32, %arg1: memref<4x36x256xbf16, #tpu.memory_space<vmem>>, %arg2: memref<32x36xbf16, #tpu.memory_space<vmem>>, %arg3: memref<4x32xf32, #tpu.memory_space<vmem>>) attributes {dimension_semantics = [#tpu.dimension_semantics<parallel>], iteration_bounds = array<i64: 1>, scalar_prefetch = 0 : i64, scratch_operands = 0 : i64, tpu.core_type = #tpu.core_type<tc>, window_params = [{transform_indices = @transform_0, window_bounds = array<i64: 4, 36, 256>}, {pipeline_mode = #tpu.pipeline_mode<synchronous>, transform_indices = @transform_1, window_bounds = array<i64: 32, 36>}, {transform_indices = @transform_2, window_bounds = array<i64: 4, 32>}]} {
    %c0 = arith.constant 0 : index
    %c0_0 = arith.constant 0 : index
    %0 = vector.load %arg2[%c0, %c0_0] : memref<32x36xbf16, #tpu.memory_space<vmem>>, vector<32x36xbf16>
    %1 = vector.shape_cast %0 : vector<32x36xbf16> to vector<1x32x36xbf16>
    %2 = vector.broadcast %1 : vector<1x32x36xbf16> to vector<4x32x36xbf16>
    %c0_1 = arith.constant 0 : index
    %c0_2 = arith.constant 0 : index
    %c0_3 = arith.constant 0 : index
    %3 = vector.load %arg1[%c0_1, %c0_2, %c0_3] : memref<4x36x256xbf16, #tpu.memory_space<vmem>>, vector<4x36x256xbf16>
    %cst = arith.constant dense<0.000000e+00> : vector<4x32x256xf32>
    %4 = tpu.matmul %2, %3, %cst {dimension_numbers = #tpu.dot_dimension_numbers<[2], [1], [1], [2], [0, 0, 0, 1, 1, 2], [0], [0]>} : vector<4x32x36xbf16>, vector<4x36x256xbf16>, vector<4x32x256xf32> -> vector<4x32x256xf32>
    %cst_4 = arith.constant 0.000000e+00 : f32
    %5 = vector.broadcast %cst_4 : f32 to vector<4x32x256xf32>
    %6 = arith.maximumf %4, %5 : vector<4x32x256xf32>
    %cst_5 = arith.constant dense<0.000000e+00> : vector<4x32xf32>
    %7 = vector.multi_reduction <add>, %6, %cst_5 [2] : vector<4x32x256xf32> to vector<4x32xf32>
    %cst_6 = arith.constant 3.906250e-03 : f32
    %8 = vector.broadcast %cst_6 : f32 to vector<4x32xf32>
    %9 = arith.mulf %7, %8 : vector<4x32xf32>
    %c0_7 = arith.constant 0 : index
    %c0_8 = arith.constant 0 : index
    %10 = vector.load %arg3[%c0_7, %c0_8] : memref<4x32xf32, #tpu.memory_space<vmem>>, vector<4x32xf32>
    tpu.vector_store %arg3[%c0_7, %c0_8], %9 {strides = array<i32>} : memref<4x32xf32, #tpu.memory_space<vmem>>, vector<4x32xf32>,
    return
  }
  func.func @transform_0(%arg0: i32) -> (i32, i32, i32) {
    %c0_i32 = arith.constant 0 : i32
    %c0_i32_0 = arith.constant 0 : i32
    %c0_i32_1 = arith.constant 0 : i32
    return %arg0, %c0_i32, %c0_i32_0 : i32, i32, i32
  }
  func.func @transform_1(%arg0: i32) -> (i32, i32) {
    %c0_i32 = arith.constant 0 : i32
    %c0_i32_0 = arith.constant 0 : i32
    %c0_i32_1 = arith.constant 0 : i32
    return %c0_i32, %c0_i32_0 : i32, i32
  }
  func.func @transform_2(%arg0: i32) -> (i32, i32) {
    %c0_i32 = arith.constant 0 : i32
    %c0_i32_0 = arith.constant 0 : i32
    return %arg0, %c0_i32 : i32, i32
  }
}

</mosaic_0001>

<llo_original>
// kernel: _teacher_pallas.1
$region0: #{_teacher_pallas.1}
  #allocation0 [shape = 'u32[]', space=smem, size = 0x4, offset = 0x4, fixed_abs, tag = 'smem constant byte address 0x4 - core index']
  #allocation1 [shape = 'u32[144,128]{1,0:T(1,128)}', space=vmem, size = 0x12000, scoped, tag = 'internal scratch']
  %s0 = inlined_call_operand.vmem [shape: bf16[4,36,256], index: 0, kind: input, shape index: {}]
  %s1 = inlined_call_operand.vmem [shape: bf16[32,36], index: 1, kind: input, shape index: {}]
  %s2 = inlined_call_operand.hbm [shape: f32[4,32], index: 2, kind: output, shape index: {}]
  %s3 = sld [smem:[#allocation0]]
  $region18: #{_teacher_pallas.1} parent=0
    _
  %s5 = ssub.s32 1, %s3
  %s6 = scalar_select 0, %s5, %s3
  $region1: #{_teacher_pallas.1} parent=0
    #allocation2 [shape = 'u8[2048]{0}', space=vmem, size = 0x800, scoped, tag = 'output window, operand 0, single buffered']
    #allocation3 [shape = 's32[1]{0}', space=sflag, size = 0x4, scoped, tag = 'scoped memory for _teacher_pallas.1']
    %7 = vsyncpa [#allocation3], 0
    // Predicated region
    $region2: #{_teacher_pallas.1} parent=1 // pred_check
      _
    $region3: #{_teacher_pallas.1} parent=1 // pred_check_branch
      %9 = sbr.rel (0) target = $region5
    $region4: #{_teacher_pallas.1} parent=1 // pred_region
      _
    $region5: #{_teacher_pallas.1} parent=1 // pred_fallthru
      _
    // Predicated region
    $region6: #{_teacher_pallas.1} parent=1 // pred_check
      _
    $region7: #{_teacher_pallas.1} parent=1 // pred_check_branch
      %11 = sbr.rel (0) target = $region9
    $region8: #{_teacher_pallas.1} parent=1 // pred_region
      _
    $region9: #{_teacher_pallas.1} parent=1 // pred_fallthru
      _
    %v13 = vld [vmem:[%s1] sm:$0xf]
    %v14 = vld [vmem:[%s1 + $0x4] sm:$0xf]
    %v15 = vld [vmem:[%s1 + $0x8] sm:$0xf]
    %v16 = vld [vmem:[%s1 + $0xc] sm:$0xf]
    %v17 = vld [vmem:[%s0] sm:$0xff]
    %v18 = vld [vmem:[%s0 + $0x8] sm:$0xff]
    %v19 = vld [vmem:[%s0 + $0x10] sm:$0xff]
    %v20 = vld [vmem:[%s0 + $0x18] sm:$0xff]
    %v21 = vld [vmem:[%s0 + $0x20] sm:$0x33]
    %v22 = vld [vmem:[%s0 + $0x28] sm:$0xff]
    %v23 = vld [vmem:[%s0 + $0x30] sm:$0xff]
    %v24 = vld [vmem:[%s0 + $0x38] sm:$0xff]
    %v25 = vld [vmem:[%s0 + $0x40] sm:$0xff]
    %v26 = vld [vmem:[%s0 + $0x48] sm:$0x33]
    %v27 = vld [vmem:[%s0 + $0x50] sm:$0xff]
    %v28 = vld [vmem:[%s0 + $0x58] sm:$0xff]
    %v29 = vld [vmem:[%s0 + $0x60] sm:$0xff]
    %v30 = vld [vmem:[%s0 + $0x68] sm:$0xff]
    %v31 = vld [vmem:[%s0 + $0x70] sm:$0x33]
    %v32 = vld [vmem:[%s0 + $0x78] sm:$0xff]
    %v33 = vld [vmem:[%s0 + $0x80] sm:$0xff]
    %v34 = vld [vmem:[%s0 + $0x88] sm:$0xff]
    %v35 = vld [vmem:[%s0 + $0x90] sm:$0xff]
    %v36 = vld [vmem:[%s0 + $0x98] sm:$0x33]
    %v41 = vunpack.c.l.b16 %v13
    %v42 = vunpack.c.l.b16 %v14
    %v43 = vunpack.c.l.b16 %v15
    %v44 = vunpack.c.l.b16 %v16
    %v45 = vpack.c.b16 %v42, %v41
    %v46 = vpack.c.b16 %v44, %v43
    %v52 = vunpack.c.l.b16 %v17
    %v53 = vunpack.c.h.b16 %v17
    %v54 = vunpack.c.l.b16 %v18
    %v55 = vunpack.c.h.b16 %v18
    %v56 = vunpack.c.l.b16 %v19
    %v57 = vunpack.c.h.b16 %v19
    %v58 = vunpack.c.l.b16 %v20
    %v59 = vunpack.c.h.b16 %v20
    %v60 = vunpack.c.l.b16 %v21
    %v61 = vunpack.c.h.b16 %v21
    %v62 = vpack.c.b16 %v54, %v52
    %v63 = vpack.c.b16 %v55, %v53
    %v64 = vpack.c.b16 %v58, %v56
    %v65 = vpack.c.b16 %v59, %v57
    %v66 = vpack.c.b16 %v60, %v60
    %v67 = vpack.c.b16 %v61, %v61
    %vm72 = vcmask 293888
    %v74 = vsel %vm72, %v45, 0
    %v77 = vsel %vm72, %v46, 0
    %vm79 = vcmask 1041408
    %v81 = vsel %vm79, %v66, 0
    %v84 = vsel %vm79, %v67, 0
    %86 = vmatprep.subr.bf16.mxu0 0
    %87 = vmatpush1.bf16.msra.mxu0 0
    %88 = vmatprep.subr.bf16.mxu0 0
    %89 = vmatpush1.bf16.msra.mxu0 0
    %90 = vmatprep.subr.bf16.mxu0 0
    %91 = vmatpush1.bf16.msra.mxu0 0
    %92 = vmatprep.subr.bf16.mxu0 0
    %93 = vmatpush1.bf16.msra.mxu0 0
    %94 = vmatprep.subr.bf16.mxu0 0
    %95 = vmatpush1.bf16.msra.mxu0 0
    %96 = vmatprep.subr.bf16.mxu0 %v84
    %97 = vmatpush1.bf16.msra.mxu0 %v81
    %98 = vmatprep.subr.bf16.mxu0 %v65
    %99 = vmatpush1.bf16.msra.mxu0 %v64
    %100 = vmatprep.subr.bf16.mxu0 %v63
    %101 = vmatpush1.bf16.msra.mxu0 %v62
    %102 = vmatprep.subr.bf16.mxu0 0
    %103 = vmatpush2.bf16.msra.mxu0 0
    %104 = vmatprep.subr.bf16.mxu0 0
    %105 = vmatpush2.bf16.msra.mxu0 0
    %106 = vmatprep.subr.bf16.mxu0 0
    %107 = vmatpush2.bf16.msra.mxu0 0
    %108 = vmatprep.subr.bf16.mxu0 0
    %109 = vmatpush2.bf16.msra.mxu0 0
    %110 = vmatprep.subr.bf16.mxu0 0
    %111 = vmatpush2.bf16.msra.mxu0 0
    %112 = vmatprep.subr.bf16.mxu0 0
    %113 = vmatpush2.bf16.msra.mxu0 0
    %114 = vmatprep.subr.bf16.mxu0 0
    %115 = vmatpush2.bf16.msra.mxu0 0
    %116 = vmatprep.subr.bf16.mxu0 0
    %117 = vmatpush2.bf16.msra.mxu0 0
    %118 = vmatprep.mubr.bf16.mxu0 0
    %119 = vmatmul.mubr.bf16.gmra.mxu0 %v74
    %v120 = vpop.f32.mrf.mxu0
    %v121 = vadd.f32 0.0, %v120
    %v122 = vpop.f32.mrf.mxu0
    %v123 = vadd.f32 0.0, %v122
    %v124 = vpop.f32.mrf.mxu0
    %v125 = vadd.f32 0.0, %v124
    %v126 = vpop.f32.mrf.mxu0
    %v127 = vadd.f32 0.0, %v126
    %128 = vmatprep.mubr.bf16.mxu0 0
    %129 = vmatmul.mubr.bf16.gmra.mxu0 %v77
    %v130 = vpop.f32.mrf.mxu0
    %v131 = vadd.f32 0.0, %v130
    %v132 = vpop.f32.mrf.mxu0
    %v133 = vadd.f32 0.0, %v132
    %v134 = vpop.f32.mrf.mxu0
    %v135 = vadd.f32 0.0, %v134
    %v136 = vpop.f32.mrf.mxu0
    %v137 = vadd.f32 0.0, %v136
    %138 = vdwg.mxu0
    %v144 = vunpack.c.l.b16 %v22
    %v145 = vunpack.c.h.b16 %v22
    %v146 = vunpack.c.l.b16 %v23
    %v147 = vunpack.c.h.b16 %v23
    %v148 = vunpack.c.l.b16 %v24
    %v149 = vunpack.c.h.b16 %v24
    %v150 = vunpack.c.l.b16 %v25
    %v151 = vunpack.c.h.b16 %v25
    %v152 = vunpack.c.l.b16 %v26
    %v153 = vunpack.c.h.b16 %v26
    %v154 = vpack.c.b16 %v146, %v144
    %v155 = vpack.c.b16 %v147, %v145
    %v156 = vpack.c.b16 %v150, %v148
    %v157 = vpack.c.b16 %v151, %v149
    %v158 = vpack.c.b16 %v152, %v152
    %v159 = vpack.c.b16 %v153, %v153
    %v165 = vsel %vm79, %v158, 0
    %v168 = vsel %vm79, %v159, 0
    %170 = vmatprep.subr.bf16.mxu0 0
    %171 = vmatpush1.bf16.msra.mxu0 0
    %172 = vmatprep.subr.bf16.mxu0 0
    %173 = vmatpush1.bf16.msra.mxu0 0
    %174 = vmatprep.subr.bf16.mxu0 0
    %175 = vmatpush1.bf16.msra.mxu0 0
    %176 = vmatprep.subr.bf16.mxu0 0
    %177 = vmatpush1.bf16.msra.mxu0 0
    %178 = vmatprep.subr.bf16.mxu0 0
    %179 = vmatpush1.bf16.msra.mxu0 0
    %180 = vmatprep.subr.bf16.mxu0 %v168
    %181 = vmatpush1.bf16.msra.mxu0 %v165
    %182 = vmatprep.subr.bf16.mxu0 %v157
    %183 = vmatpush1.bf16.msra.mxu0 %v156
    %184 = vmatprep.subr.bf16.mxu0 %v155
    %185 = vmatpush1.bf16.msra.mxu0 %v154
    %186 = vmatprep.subr.bf16.mxu0 0
    %187 = vmatpush2.bf16.msra.mxu0 0
    %188 = vmatprep.subr.bf16.mxu0 0
    %189 = vmatpush2.bf16.msra.mxu0 0
    %190 = vmatprep.subr.bf16.mxu0 0
    %191 = vmatpush2.bf16.msra.mxu0 0
    %192 = vmatprep.subr.bf16.mxu0 0
    %193 = vmatpush2.bf16.msra.mxu0 0
    %194 = vmatprep.subr.bf16.mxu0 0
    %195 = vmatpush2.bf16.msra.mxu0 0
    %196 = vmatprep.subr.bf16.mxu0 0
    %197 = vmatpush2.bf16.msra.mxu0 0
    %198 = vmatprep.subr.bf16.mxu0 0
    %199 = vmatpush2.bf16.msra.mxu0 0
    %200 = vmatprep.subr.bf16.mxu0 0
    %201 = vmatpush2.bf16.msra.mxu0 0
    %202 = vmatprep.mubr.bf16.mxu0 0
    %203 = vmatmul.mubr.bf16.gmra.mxu0 %v74
    %v204 = vpop.f32.mrf.mxu0
    %v205 = vadd.f32 0.0, %v204
    %v206 = vpop.f32.mrf.mxu0
    %v207 = vadd.f32 0.0, %v206
    %v208 = vpop.f32.mrf.mxu0
    %v209 = vadd.f32 0.0, %v208
    %v210 = vpop.f32.mrf.mxu0
    %v211 = vadd.f32 0.0, %v210
    %212 = vmatprep.mubr.bf16.mxu0 0
    %213 = vmatmul.mubr.bf16.gmra.mxu0 %v77
    %v214 = vpop.f32.mrf.mxu0
    %v215 = vadd.f32 0.0, %v214
    %v216 = vpop.f32.mrf.mxu0
    %v217 = vadd.f32 0.0, %v216
    %v218 = vpop.f32.mrf.mxu0
    %v219 = vadd.f32 0.0, %v218
    %v220 = vpop.f32.mrf.mxu0
    %v221 = vadd.f32 0.0, %v220
    %222 = vdwg.mxu0
    %v228 = vunpack.c.l.b16 %v27
    %v229 = vunpack.c.h.b16 %v27
    %v230 = vunpack.c.l.b16 %v28
    %v231 = vunpack.c.h.b16 %v28
    %v232 = vunpack.c.l.b16 %v29
    %v233 = vunpack.c.h.b16 %v29
    %v234 = vunpack.c.l.b16 %v30
    %v235 = vunpack.c.h.b16 %v30
    %v236 = vunpack.c.l.b16 %v31
    %v237 = vunpack.c.h.b16 %v31
    %v238 = vpack.c.b16 %v230, %v228
    %v239 = vpack.c.b16 %v231, %v229
    %v240 = vpack.c.b16 %v234, %v232
    %v241 = vpack.c.b16 %v235, %v233
    %v242 = vpack.c.b16 %v236, %v236
    %v243 = vpack.c.b16 %v237, %v237
    %v249 = vsel %vm79, %v242, 0
    %v252 = vsel %vm79, %v243, 0
    %254 = vmatprep.subr.bf16.mxu0 0
    %255 = vmatpush1.bf16.msra.mxu0 0
    %256 = vmatprep.subr.bf16.mxu0 0
    %257 = vmatpush1.bf16.msra.mxu0 0
    %258 = vmatprep.subr.bf16.mxu0 0
    %259 = vmatpush1.bf16.msra.mxu0 0
    %260 = vmatprep.subr.bf16.mxu0 0
    %261 = vmatpush1.bf16.msra.mxu0 0
    %262 = vmatprep.subr.bf16.mxu0 0
    %263 = vmatpush1.bf16.msra.mxu0 0
    %264 = vmatprep.subr.bf16.mxu0 %v252
    %265 = vmatpush1.bf16.msra.mxu0 %v249
    %266 = vmatprep.subr.bf16.mxu0 %v241
    %267 = vmatpush1.bf16.msra.mxu0 %v240
    %268 = vmatprep.subr.bf16.mxu0 %v239
    %269 = vmatpush1.bf16.msra.mxu0 %v238
    %270 = vmatprep.subr.bf16.mxu0 0
    %271 = vmatpush2.bf16.msra.mxu0 0
    %272 = vmatprep.subr.bf16.mxu0 0
    %273 = vmatpush2.bf16.msra.mxu0 0
    %274 = vmatprep.subr.bf16.mxu0 0
    %275 = vmatpush2.bf16.msra.mxu0 0
    %276 = vmatprep.subr.bf16.mxu0 0
    %277 = vmatpush2.bf16.msra.mxu0 0
    %278 = vmatprep.subr.bf16.mxu0 0
    %279 = vmatpush2.bf16.msra.mxu0 0
    %280 = vmatprep.subr.bf16.mxu0 0
    %281 = vmatpush2.bf16.msra.mxu0 0
    %282 = vmatprep.subr.bf16.mxu0 0
    %283 = vmatpush2.bf16.msra.mxu0 0
    %284 = vmatprep.subr.bf16.mxu0 0
    %285 = vmatpush2.bf16.msra.mxu0 0
    %286 = vmatprep.mubr.bf16.mxu0 0
    %287 = vmatmul.mubr.bf16.gmra.mxu0 %v74
    %v288 = vpop.f32.mrf.mxu0
    %v289 = vadd.f32 0.0, %v288
    %v290 = vpop.f32.mrf.mxu0
    %v291 = vadd.f32 0.0, %v290
    %v292 = vpop.f32.mrf.mxu0
    %v293 = vadd.f32 0.0, %v292
    %v294 = vpop.f32.mrf.mxu0
    %v295 = vadd.f32 0.0, %v294
    %296 = vmatprep.mubr.bf16.mxu0 0
    %297 = vmatmul.mubr.bf16.gmra.mxu0 %v77
    %v298 = vpop.f32.mrf.mxu0
    %v299 = vadd.f32 0.0, %v298
    %v300 = vpop.f32.mrf.mxu0
    %v301 = vadd.f32 0.0, %v300
    %v302 = vpop.f32.mrf.mxu0
    %v303 = vadd.f32 0.0, %v302
    %v304 = vpop.f32.mrf.mxu0
    %v305 = vadd.f32 0.0, %v304
    %306 = vdwg.mxu0
    %v312 = vunpack.c.l.b16 %v32
    %v313 = vunpack.c.h.b16 %v32
    %v314 = vunpack.c.l.b16 %v33
    %v315 = vunpack.c.h.b16 %v33
    %v316 = vunpack.c.l.b16 %v34
    %v317 = vunpack.c.h.b16 %v34
    %v318 = vunpack.c.l.b16 %v35
    %v319 = vunpack.c.h.b16 %v35
    %v320 = vunpack.c.l.b16 %v36
    %v321 = vunpack.c.h.b16 %v36
    %v322 = vpack.c.b16 %v314, %v312
    %v323 = vpack.c.b16 %v315, %v313
    %v324 = vpack.c.b16 %v318, %v316
    %v325 = vpack.c.b16 %v319, %v317
    %v326 = vpack.c.b16 %v320, %v320
    %v327 = vpack.c.b16 %v321, %v321
    %v333 = vsel %vm79, %v326, 0
    %v336 = vsel %vm79, %v327, 0
    %338 = vmatprep.subr.bf16.mxu0 0
    %339 = vmatpush1.bf16.msra.mxu0 0
    %340 = vmatprep.subr.bf16.mxu0 0
    %341 = vmatpush1.bf16.msra.mxu0 0
    %342 = vmatprep.subr.bf16.mxu0 0
    %343 = vmatpush1.bf16.msra.mxu0 0
    %344 = vmatprep.subr.bf16.mxu0 0
    %345 = vmatpush1.bf16.msra.mxu0 0
    %346 = vmatprep.subr.bf16.mxu0 0
    %347 = vmatpush1.bf16.msra.mxu0 0
    %348 = vmatprep.subr.bf16.mxu0 %v336
    %349 = vmatpush1.bf16.msra.mxu0 %v333
    %350 = vmatprep.subr.bf16.mxu0 %v325
    %351 = vmatpush1.bf16.msra.mxu0 %v324
    %352 = vmatprep.subr.bf16.mxu0 %v323
    %353 = vmatpush1.bf16.msra.mxu0 %v322
    %354 = vmatprep.subr.bf16.mxu0 0
    %355 = vmatpush2.bf16.msra.mxu0 0
    %356 = vmatprep.subr.bf16.mxu0 0
    %357 = vmatpush2.bf16.msra.mxu0 0
    %358 = vmatprep.subr.bf16.mxu0 0
    %359 = vmatpush2.bf16.msra.mxu0 0
    %360 = vmatprep.subr.bf16.mxu0 0
    %361 = vmatpush2.bf16.msra.mxu0 0
    %362 = vmatprep.subr.bf16.mxu0 0
    %363 = vmatpush2.bf16.msra.mxu0 0
    %364 = vmatprep.subr.bf16.mxu0 0
    %365 = vmatpush2.bf16.msra.mxu0 0
    %366 = vmatprep.subr.bf16.mxu0 0
    %367 = vmatpush2.bf16.msra.mxu0 0
    %368 = vmatprep.subr.bf16.mxu0 0
    %369 = vmatpush2.bf16.msra.mxu0 0
    %370 = vmatprep.mubr.bf16.mxu0 0
    %371 = vmatmul.mubr.bf16.gmra.mxu0 %v74
    %v372 = vpop.f32.mrf.mxu0
    %v373 = vadd.f32 0.0, %v372
    %v374 = vpop.f32.mrf.mxu0
    %v375 = vadd.f32 0.0, %v374
    %v376 = vpop.f32.mrf.mxu0
    %v377 = vadd.f32 0.0, %v376
    %v378 = vpop.f32.mrf.mxu0
    %v379 = vadd.f32 0.0, %v378
    %380 = vmatprep.mubr.bf16.mxu0 0
    %381 = vmatmul.mubr.bf16.gmra.mxu0 %v77
    %v382 = vpop.f32.mrf.mxu0
    %v383 = vadd.f32 0.0, %v382
    %v384 = vpop.f32.mrf.mxu0
    %v385 = vadd.f32 0.0, %v384
    %v386 = vpop.f32.mrf.mxu0
    %v387 = vadd.f32 0.0, %v386
    %v388 = vpop.f32.mrf.mxu0
    %v389 = vadd.f32 0.0, %v388
    %390 = vdwg.mxu0
    %v391 = vmax.f32 %v121, 0.0
    %v392 = vmax.f32 %v123, 0.0
    %v393 = vmax.f32 %v125, 0.0
    %v394 = vmax.f32 %v127, 0.0
    %v395 = vmax.f32 %v131, 0.0
    %v396 = vmax.f32 %v133, 0.0
    %v397 = vmax.f32 %v135, 0.0
    %v398 = vmax.f32 %v137, 0.0
    %v399 = vmax.f32 %v205, 0.0
    %v400 = vmax.f32 %v207, 0.0
    %v401 = vmax.f32 %v209, 0.0
    %v402 = vmax.f32 %v211, 0.0
    %v403 = vmax.f32 %v215, 0.0
    %v404 = vmax.f32 %v217, 0.0
    %v405 = vmax.f32 %v219, 0.0
    %v406 = vmax.f32 %v221, 0.0
    %v407 = vmax.f32 %v289, 0.0
    %v408 = vmax.f32 %v291, 0.0
    %v409 = vmax.f32 %v293, 0.0
    %v410 = vmax.f32 %v295, 0.0
    %v411 = vmax.f32 %v299, 0.0
    %v412 = vmax.f32 %v301, 0.0
    %v413 = vmax.f32 %v303, 0.0
    %v414 = vmax.f32 %v305, 0.0
    %v415 = vmax.f32 %v373, 0.0
    %v416 = vmax.f32 %v375, 0.0
    %v417 = vmax.f32 %v377, 0.0
    %v418 = vmax.f32 %v379, 0.0
    %v419 = vmax.f32 %v383, 0.0
    %v420 = vmax.f32 %v385, 0.0
    %v421 = vmax.f32 %v387, 0.0
    %v422 = vmax.f32 %v389, 0.0
    %v423 = vadd.f32 %v391, %v392
    %424 = vadd.xlane.f32.xlu0 %v423
    %v425 = vpop.xlane.xlu0 %424
    %v426 = vadd.f32 %v393, %v394
    %427 = vadd.xlane.f32.xlu0 %v426
    %v428 = vpop.xlane.xlu0 %427
    %v429 = vadd.f32 %v395, %v396
    %430 = vadd.xlane.f32.xlu0 %v429
    %v431 = vpop.xlane.xlu0 %430
    %v432 = vadd.f32 %v397, %v398
    %433 = vadd.xlane.f32.xlu0 %v432
    %v434 = vpop.xlane.xlu0 %433
    %v435 = vadd.f32 %v399, %v400
    %436 = vadd.xlane.f32.xlu0 %v435
    %v437 = vpop.xlane.xlu0 %436
    %v438 = vadd.f32 %v401, %v402
    %439 = vadd.xlane.f32.xlu0 %v438
    %v440 = vpop.xlane.xlu0 %439
    %v441 = vadd.f32 %v403, %v404
    %442 = vadd.xlane.f32.xlu0 %v441
    %v443 = vpop.xlane.xlu0 %442
    %v444 = vadd.f32 %v405, %v406
    %445 = vadd.xlane.f32.xlu0 %v444
    %v446 = vpop.xlane.xlu0 %445
    %v447 = vadd.f32 %v407, %v408
    %448 = vadd.xlane.f32.xlu0 %v447
    %v449 = vpop.xlane.xlu0 %448
    %v450 = vadd.f32 %v409, %v410
    %451 = vadd.xlane.f32.xlu0 %v450
    %v452 = vpop.xlane.xlu0 %451
    %v453 = vadd.f32 %v411, %v412
    %454 = vadd.xlane.f32.xlu0 %v453
    %v455 = vpop.xlane.xlu0 %454
    %v456 = vadd.f32 %v413, %v414
    %457 = vadd.xlane.f32.xlu0 %v456
    %v458 = vpop.xlane.xlu0 %457
    %v459 = vadd.f32 %v415, %v416
    %460 = vadd.xlane.f32.xlu0 %v459
    %v461 = vpop.xlane.xlu0 %460
    %v462 = vadd.f32 %v417, %v418
    %463 = vadd.xlane.f32.xlu0 %v462
    %v464 = vpop.xlane.xlu0 %463
    %v465 = vadd.f32 %v419, %v420
    %466 = vadd.xlane.f32.xlu0 %v465
    %v467 = vpop.xlane.xlu0 %466
    %v468 = vadd.f32 %v421, %v422
    %469 = vadd.xlane.f32.xlu0 %v468
    %v470 = vpop.xlane.xlu0 %469
    %v471 = vmul.f32 %v425, 0.00390625
    %v472 = vmul.f32 %v428, 0.00390625
    %v473 = vmul.f32 %v431, 0.00390625
    %v474 = vmul.f32 %v434, 0.00390625
    %v475 = vmul.f32 %v437, 0.00390625
    %v476 = vmul.f32 %v440, 0.00390625
    %v477 = vmul.f32 %v443, 0.00390625
    %v478 = vmul.f32 %v446, 0.00390625
    %v479 = vmul.f32 %v449, 0.00390625
    %v480 = vmul.f32 %v452, 0.00390625
    %v481 = vmul.f32 %v455, 0.00390625
    %v482 = vmul.f32 %v458, 0.00390625
    %v483 = vmul.f32 %v461, 0.00390625
    %v484 = vmul.f32 %v464, 0.00390625
    %v485 = vmul.f32 %v467, 0.00390625
    %v486 = vmul.f32 %v470, 0.00390625
    %v503 = vlaneseq
    %v504 = vand.u32 %v503, 127
    %v505 = vlaneseq
    %v506 = vshrl.u32 %v505, 7
    %v507 = vsub.s32 %v504, %v506
    %v508 = vrot.slane %v471, %v507
    %v509 = vadd.s32 %v504, 4294967288
    %v510 = vlaneseq
    %v511 = vshrl.u32 %v510, 7
    %v512 = vsub.s32 %v509, %v511
    %v513 = vrot.slane %v472, %v512
    %vm514 = vcmask 130112
    %v515 = vsel %vm514, %v513, %v508
    %v516 = vadd.s32 %v504, 4294967280
    %v517 = vlaneseq
    %v518 = vshrl.u32 %v517, 7
    %v519 = vsub.s32 %v516, %v518
    %v520 = vrot.slane %v473, %v519
    %vm521 = vcmask 195712
    %v522 = vsel %vm521, %v520, %v515
    %v523 = vadd.s32 %v504, 4294967272
    %v524 = vlaneseq
    %v525 = vshrl.u32 %v524, 7
    %v526 = vsub.s32 %v523, %v525
    %v527 = vrot.slane %v474, %v526
    %vm528 = vcmask 261312
    %v529 = vsel %vm528, %v527, %v522
    %v530 = vlaneseq
    %v531 = vshrl.u32 %v530, 7
    %v532 = vsub.s32 %v504, %v531
    %v533 = vrot.slane %v475, %v532
    %v534 = vlaneseq
    %v535 = vshrl.u32 %v534, 7
    %v536 = vsub.s32 %v509, %v535
    %v537 = vrot.slane %v476, %v536
    %v538 = vsel %vm514, %v537, %v533
    %v539 = vlaneseq
    %v540 = vshrl.u32 %v539, 7
    %v541 = vsub.s32 %v516, %v540
    %v542 = vrot.slane %v477, %v541
    %v543 = vsel %vm521, %v542, %v538
    %v544 = vlaneseq
    %v545 = vshrl.u32 %v544, 7
    %v546 = vsub.s32 %v523, %v545
    %v547 = vrot.slane %v478, %v546
    %v548 = vsel %vm528, %v547, %v543
    %v549 = vlaneseq
    %v550 = vshrl.u32 %v549, 7
    %v551 = vsub.s32 %v504, %v550
    %v552 = vrot.slane %v479, %v551
    %v553 = vlaneseq
    %v554 = vshrl.u32 %v553, 7
    %v555 = vsub.s32 %v509, %v554
    %v556 = vrot.slane %v480, %v555
    %v557 = vsel %vm514, %v556, %v552
    %v558 = vlaneseq
    %v559 = vshrl.u32 %v558, 7
    %v560 = vsub.s32 %v516, %v559
    %v561 = vrot.slane %v481, %v560
    %v562 = vsel %vm521, %v561, %v557
    %v563 = vlaneseq
    %v564 = vshrl.u32 %v563, 7
    %v565 = vsub.s32 %v523, %v564
    %v566 = vrot.slane %v482, %v565
    %v567 = vsel %vm528, %v566, %v562
    %v568 = vlaneseq
    %v569 = vshrl.u32 %v568, 7
    %v570 = vsub.s32 %v504, %v569
    %v571 = vrot.slane %v483, %v570
    %v572 = vlaneseq
    %v573 = vshrl.u32 %v572, 7
    %v574 = vsub.s32 %v509, %v573
    %v575 = vrot.slane %v484, %v574
    %v576 = vsel %vm514, %v575, %v571
    %v577 = vlaneseq
    %v578 = vshrl.u32 %v577, 7
    %v579 = vsub.s32 %v516, %v578
    %v580 = vrot.slane %v485, %v579
    %v581 = vsel %vm521, %v580, %v576
    %v582 = vlaneseq
    %v583 = vshrl.u32 %v582, 7
    %v584 = vsub.s32 %v523, %v583
    %v585 = vrot.slane %v486, %v584
    %v586 = vsel %vm528, %v585, %v581
    %vm587 = vcmask 1041409
    %v588 = vsel %vm587, %v548, %v529
    %vm589 = vcmask 1042434
    %v590 = vsel %vm589, %v567, %v588
    %vm591 = vcmask 1043459
    %v592 = vsel %vm591, %v586, %v590
    %vm594 = vcmask 257024
    %595 = vst.msk [vmem:[#allocation2] sm:$0xf] %vm594, %v592
    // Predicated region
    $region10: #{_teacher_pallas.1} parent=1 // pred_check
      _
    $region11: #{_teacher_pallas.1} parent=1 // pred_check_branch
      %597 = sbr.rel (0) target = $region13
    $region12: #{_teacher_pallas.1} parent=1 // pred_region
      %s599 = ssub.s32 64, 64
      %600 = vsyncadd [#allocation3], %s599
      %s602 = sshll.u32 [#allocation2], 4
      %s603 = int_to_ptr.vmem [resolvable:$true] %s602
      %605 = dma.vmem_to_hbm [thread:$0]  %s603, 64, %s2, [#allocation3]
    $region13: #{_teacher_pallas.1} parent=1 // pred_fallthru
      _
    // Predicated region
    $region14: #{_teacher_pallas.1} parent=1 // pred_check
      _
    $region15: #{_teacher_pallas.1} parent=1 // pred_check_branch
      %607 = sbr.rel (0) target = $region17
    $region16: #{_teacher_pallas.1} parent=1 // pred_region
      %608 = dma.done [#allocation3], 64
    $region17: #{_teacher_pallas.1} parent=1 // pred_fallthru
      _
    %609 = vsyncpa [#allocation3], 1

</llo_original>
